<compile_context>
chip_gen: v5e
topology: v5e:2x2
jax: 0.10.0
libtpu: 0.0.40
codegen_flags: <defaults>
</compile_context>

<pallas_src>
import functools

import jax
import jax.numpy as jnp
from jax.experimental import pallas as pl
from jax.experimental.pallas import tpu as pltpu


# ----------------------------------------------------------------------------- kernel
def _rmsnorm_kernel(x_ref, w_ref, o_ref, *, eps, inv_h):
    # Upcast to f32 exactly like hidden_states.to(torch.float32).
    xf = x_ref[...].astype(jnp.float32)                      # (bt, Hp) f32
    # Sum of squares over the (possibly zero-padded) lane axis, divided by the
    # *true* hidden size -> identical to mean over the unpadded hidden dim.
    ssq = jnp.sum(xf * xf, axis=-1, keepdims=True)           # (bt, 1) XLU reduce
    inv = jax.lax.rsqrt(ssq * inv_h + eps)                   # EUP rsqrt
    w = w_ref[...].astype(jnp.float32)                       # (1, Hp) f32
    # Re-upcast from the input ref for the normalize so the first f32 tile
    # need not stay live across the reduce (smaller VMEM peak, bigger tiles).
    o_ref[...] = (w * (x_ref[...].astype(jnp.float32) * inv)).astype(o_ref.dtype)


# ----------------------------------------------------------------------------- tiling helpers
def _sublane_pack(dtype) -> int:
    # Rows packed per vreg sublane group: 8 for f32, 16 for bf16, 32 for int8/fp8.
    return max(8, 32 // jnp.dtype(dtype).itemsize)


def _round_up(x: int, m: int) -> int:
    return ((x + m - 1) // m) * m


def _vmem_capacity_bytes() -> int:
    try:
        return int(pltpu.get_tpu_info().vmem_capacity_bytes)
    except Exception:
        pass
    # Generation-aware fallback: only v7x has 64 MiB per TC; v5e/v6e have 128 MiB.
    try:
        kind = jax.devices()[0].device_kind.lower()
        if "v7" in kind or "7x" in kind:
            return 64 * 1024 * 1024
    except Exception:
        pass
    return 128 * 1024 * 1024


def _pick_block_tokens(n_tokens: int, hidden_pad: int, dtype, vmem_budget: int) -> int:
    pack = _sublane_pack(dtype)
    isz = jnp.dtype(dtype).itemsize
    # Per-row VMEM cost: double-buffered input + output blocks in the input
    # dtype (4*isz) plus ~one f32-wide row temporary (the re-upcast keeps only
    # one f32 tile live at a time).
    bytes_per_row = hidden_pad * (4 * isz + 4)
    bt = max(pack, vmem_budget // max(bytes_per_row, 1))
    bt = min(bt, 1024)                              # no extra HBM BW past ~1K rows
    bt = (bt // pack) * pack                        # align to dtype sublane pack
    bt = max(bt, pack)
    bt = min(bt, _round_up(n_tokens, pack))         # don't over-allocate for tiny N
    return bt


# ----------------------------------------------------------------------------- wrapper
def llama_rms_norm_v2(hidden_states, weight, eps, *, block_tokens=None):
    """hidden_states: (..., H); weight: (H,). Returns same shape/dtype as input."""
    orig_shape = hidden_states.shape
    orig_dtype = hidden_states.dtype
    H = orig_shape[-1]
    x2d = hidden_states.reshape(-1, H)
    N = x2d.shape[0]

    # Lane-dense hidden axis: pad only when H is not a multiple of 128 (the
    # real Llama sizes 4096/8192 never pad). The mean divides by the true H.
    H_pad = _round_up(H, 128)
    if H_pad != H:
        x2d = jnp.pad(x2d, ((0, 0), (0, H_pad - H)))
        w2d = jnp.pad(weight.reshape(1, H), ((0, 0), (0, H_pad - H)))
    else:
        w2d = weight.reshape(1, H)

    vmem_phys = _vmem_capacity_bytes()
    vmem_budget = int(vmem_phys * 0.65)

    if block_tokens is None:
        block_tokens = _pick_block_tokens(N, H_pad, orig_dtype, vmem_budget)
    pack = _sublane_pack(orig_dtype)
    block_tokens = max(pack, _round_up(block_tokens, pack))

    # No token-axis padding: Pallas handles the ragged last block (padded
    # reads, masked writes). Rows are independent, so garbage tail rows only
    # produce garbage that is never written back.
    grid = (pl.cdiv(N, block_tokens),)

    # Generous VMEM cap: permits allocation, never forces it.
    vmem_limit = max(vmem_phys - (4 << 20), 32 << 20)

    out = pl.pallas_call(
        functools.partial(_rmsnorm_kernel, eps=float(eps), inv_h=1.0 / float(H)),
        out_shape=jax.ShapeDtypeStruct((N, H_pad), orig_dtype),
        grid_spec=pltpu.PrefetchScalarGridSpec(
            num_scalar_prefetch=0,
            grid=grid,
            in_specs=[
                pl.BlockSpec((block_tokens, H_pad), lambda i: (i, 0)),
                pl.BlockSpec((1, H_pad), lambda i: (0, 0)),   # resident weight row
            ],
            out_specs=pl.BlockSpec((block_tokens, H_pad), lambda i: (i, 0)),
        ),
        compiler_params=pltpu.CompilerParams(
            # "parallel" lets the runtime shard the token axis across TCs on
            # multi-TC chips (v7x); no-op on single-TC v5e/v6e.
            # TODO(synk): if profiling on v7x shows a single TC streaming,
            # switch to pltpu.CORE_PARALLEL / core_map for explicit sharding.
            dimension_semantics=("parallel",),
            vmem_limit_bytes=int(vmem_limit),
        ),
    )(x2d, w2d)

    if H_pad != H:
        out = out[:, :H]
    return out.reshape(orig_shape)


# ----------------------------------------------------------------------------- reference
def _reference(hidden_states, weight, eps):
    x = hidden_states.astype(jnp.float32)
    var = jnp.mean(x * x, axis=-1, keepdims=True)
    y = weight.astype(jnp.float32) * (x * jax.lax.rsqrt(var + eps))
    return y.astype(hidden_states.dtype)


def _check(out, x, weight, eps):
    ref = _reference(x, weight, eps)
    assert out.shape == x.shape and out.dtype == x.dtype
    assert jnp.allclose(out.astype(jnp.float32), ref.astype(jnp.float32),
                        atol=1e-2, rtol=1e-2)


if __name__ == "__main__":
    key = jax.random.PRNGKey(0)
    eps = 1e-6

    batch, seq, hidden = 2, 8, 32
    kx, kw, kx2, kx3 = jax.random.split(key, 4)
    # nn.Parameter(torch.ones(hidden_size)) is f32 ones; perturb deterministically
    # so the weight multiply is actually exercised.
    weight = (jnp.ones((hidden,), dtype=jnp.float32)
              + 0.01 * jax.random.normal(kw, (hidden,), dtype=jnp.float32))

    # Case 1: small "nice" shape, bf16 input (exercises the lane-padding path, H=32).
    x = jax.random.normal(kx, (batch, seq, hidden), dtype=jnp.float32).astype(jnp.bfloat16)
    out = jax.block_until_ready(llama_rms_norm_v2(x, weight, eps))
    _check(out, x, weight, eps)

    # Case 2: token count not divisible by the sublane pack (ragged last block,
    # masked writes, no wrapper padding on the token axis).
    x2 = jax.random.normal(kx2, (1, 5, hidden), dtype=jnp.float32).astype(jnp.bfloat16)
    out2 = jax.block_until_ready(llama_rms_norm_v2(x2, weight, eps))
    _check(out2, x2, weight, eps)

    # Case 3: lane-dense hidden (H=128), forced small tile so grid > 1 with a
    # ragged final block (40 tokens, 16-row tiles -> 3 blocks, last one partial).
    hidden3 = 128
    weight3 = (jnp.ones((hidden3,), dtype=jnp.float32)
               + 0.01 * jax.random.normal(kw, (hidden3,), dtype=jnp.float32))
    x3 = jax.random.normal(kx3, (5, 8, hidden3), dtype=jnp.float32).astype(jnp.bfloat16)
    out3 = jax.block_until_ready(llama_rms_norm_v2(x3, weight3, eps, block_tokens=16))
    _check(out3, x3, weight3, eps)

    print("KERNEL_OK")
</pallas_src>

<mosaic_0001>
module attributes {stable_mosaic.version = 11 : i64} {
  func.func @_rmsnorm_kernel(%arg0: i32, %arg1: memref<16x128xbf16, #tpu.memory_space<vmem>>, %arg2: memref<1x128xf32, #tpu.memory_space<vmem>>, %arg3: memref<16x128xbf16, #tpu.memory_space<vmem>>) attributes {dimension_semantics = [#tpu.dimension_semantics<parallel>], iteration_bounds = array<i64: 1>, scalar_prefetch = 0 : i64, scratch_operands = 0 : i64, tpu.core_type = #tpu.core_type<tc>, window_params = [{transform_indices = @transform_0, window_bounds = array<i64: 16, 128>}, {pipeline_mode = #tpu.pipeline_mode<synchronous>, transform_indices = @transform_1, window_bounds = array<i64: 1, 128>}, {transform_indices = @transform_2, window_bounds = array<i64: 16, 128>}]} {
    %c0 = arith.constant 0 : index
    %c0_0 = arith.constant 0 : index
    %0 = vector.load %arg1[%c0, %c0_0] : memref<16x128xbf16, #tpu.memory_space<vmem>>, vector<16x128xbf16>
    %1 = arith.extf %0 : vector<16x128xbf16> to vector<16x128xf32>
    %2 = arith.mulf %1, %1 : vector<16x128xf32>
    %cst = arith.constant dense<0.000000e+00> : vector<16xf32>
    %3 = vector.multi_reduction <add>, %2, %cst [1] : vector<16x128xf32> to vector<16xf32>
    %4 = vector.shape_cast %3 : vector<16xf32> to vector<16x1xf32>
    %cst_1 = arith.constant 3.125000e-02 : f32
    %5 = vector.broadcast %cst_1 : f32 to vector<16x1xf32>
    %6 = arith.mulf %4, %5 : vector<16x1xf32>
    %cst_2 = arith.constant 9.99999997E-7 : f32
    %7 = vector.broadcast %cst_2 : f32 to vector<16x1xf32>
    %8 = arith.addf %6, %7 : vector<16x1xf32>
    %9 = math.rsqrt %8 : vector<16x1xf32>
    %c0_3 = arith.constant 0 : index
    %c0_4 = arith.constant 0 : index
    %10 = vector.load %arg2[%c0_3, %c0_4] : memref<1x128xf32, #tpu.memory_space<vmem>>, vector<1x128xf32>
    %c0_5 = arith.constant 0 : index
    %c0_6 = arith.constant 0 : index
    %11 = vector.load %arg1[%c0_5, %c0_6] : memref<16x128xbf16, #tpu.memory_space<vmem>>, vector<16x128xbf16>
    %12 = arith.extf %11 : vector<16x128xbf16> to vector<16x128xf32>
    %13 = vector.broadcast %9 : vector<16x1xf32> to vector<16x128xf32>
    %14 = arith.mulf %12, %13 : vector<16x128xf32>
    %15 = vector.broadcast %10 : vector<1x128xf32> to vector<16x128xf32>
    %16 = arith.mulf %15, %14 : vector<16x128xf32>
    %17 = arith.truncf %16 : vector<16x128xf32> to vector<16x128xbf16>
    %c0_7 = arith.constant 0 : index
    %c0_8 = arith.constant 0 : index
    %18 = vector.load %arg3[%c0_7, %c0_8] : memref<16x128xbf16, #tpu.memory_space<vmem>>, vector<16x128xbf16>
    tpu.vector_store %arg3[%c0_7, %c0_8], %17 {strides = array<i32>} : memref<16x128xbf16, #tpu.memory_space<vmem>>, vector<16x128xbf16>,
    return
  }
  func.func @transform_0(%arg0: i32) -> (i32, i32) {
    %c0_i32 = arith.constant 0 : i32
    %c0_i32_0 = arith.constant 0 : i32
    return %arg0, %c0_i32 : i32, i32
  }
  func.func @transform_1(%arg0: i32) -> (i32, i32) {
    %c0_i32 = arith.constant 0 : i32
    %c0_i32_0 = arith.constant 0 : i32
    %c0_i32_1 = arith.constant 0 : i32
    return %c0_i32, %c0_i32_0 : i32, i32
  }
  func.func @transform_2(%arg0: i32) -> (i32, i32) {
    %c0_i32 = arith.constant 0 : i32
    %c0_i32_0 = arith.constant 0 : i32
    return %arg0, %c0_i32 : i32, i32
  }
}

</mosaic_0001>

<llo_original>
// kernel: tpu_custom_call.1
$region0: #{tpu_custom_call.1}
  #allocation0 [shape = 'u32[]', space=smem, size = 0x4, offset = 0x4, fixed_abs, tag = 'smem constant byte address 0x4 - core index']
  #allocation1 [shape = 'u32[72,128]{1,0:T(1,128)}', space=vmem, size = 0x9000, scoped, tag = 'internal scratch']
  %s0 = inlined_call_operand.hbm [shape: bf16[16,128], index: 0, kind: input, shape index: {}]
  %s1 = inlined_call_operand.hbm [shape: f32[1,128], index: 1, kind: input, shape index: {}]
  %s2 = inlined_call_operand.hbm [shape: bf16[16,128], index: 2, kind: output, shape index: {}]
  %s3 = sld [smem:[#allocation0]]
  $region26: #{tpu_custom_call.1} parent=0
    _
  %s5 = ssub.s32 1, %s3
  %s6 = scalar_select 0, %s5, %s3
  $region1: #{tpu_custom_call.1} parent=0
    #allocation2 [shape = 'u8[4096]{0}', space=vmem, size = 0x1000, scoped, tag = 'input window, operand 0, single buffered']
    #allocation3 [shape = 's32[1]{0}', space=sflag, size = 0x4, scoped, tag = 'scoped memory for tpu_custom_call.1']
    #allocation4 [shape = 's32[1]{0}', space=sflag, size = 0x4, scoped, tag = 'scoped memory for tpu_custom_call.1']
    #allocation5 [shape = 'u8[512]{0}', space=vmem, size = 0x400, scoped, tag = 'input window, operand 1, single buffered']
    #allocation6 [shape = 's32[1]{0}', space=sflag, size = 0x4, scoped, tag = 'scoped memory for tpu_custom_call.1']
    #allocation7 [shape = 'u8[4096]{0}', space=vmem, size = 0x1000, scoped, tag = 'output window, operand 0, single buffered']
    %7 = vsyncpa [#allocation3], 0
    %8 = vsyncpa [#allocation6], 0
    %9 = vsyncpa [#allocation4], 0
    // Predicated region
    $region2: #{tpu_custom_call.1} parent=1 // pred_check
      _
    $region3: #{tpu_custom_call.1} parent=1 // pred_check_branch
      %11 = sbr.rel (0) target = $region5
    $region4: #{tpu_custom_call.1} parent=1 // pred_region
      %13 = vsyncadd [#allocation3], 0
      %s14 = sshll.u32 %s0, 4
      %s15 = int_to_ptr.hbm [resolvable:$true] %s14
      %s16 = sshll.u32 [#allocation2], 4
      %s17 = int_to_ptr.vmem [resolvable:$true] %s16
      %22 = dma.hbm_to_vmem [thread:$0]  %s15, 128, %s17, [#allocation3], 64, 64, 4
    $region5: #{tpu_custom_call.1} parent=1 // pred_fallthru
      _
    // Predicated region
    $region6: #{tpu_custom_call.1} parent=1 // pred_check
      _
    $region7: #{tpu_custom_call.1} parent=1 // pred_check_branch
      %24 = sbr.rel (0) target = $region9
    $region8: #{tpu_custom_call.1} parent=1 // pred_region
      %26 = vsyncadd [#allocation6], 0
      %s28 = sshll.u32 %s1, 4
      %s29 = int_to_ptr.hbm [resolvable:$true] %s28
      %s30 = sshll.u32 [#allocation5], 4
      %s31 = int_to_ptr.vmem [resolvable:$true] %s30
      %33 = dma.hbm_to_vmem [thread:$0]  %s29, 16, %s31, [#allocation6]
    $region9: #{tpu_custom_call.1} parent=1 // pred_fallthru
      _
    // Predicated region
    $region10: #{tpu_custom_call.1} parent=1 // pred_check
      _
    $region11: #{tpu_custom_call.1} parent=1 // pred_check_branch
      %35 = sbr.rel (0) target = $region13
    $region12: #{tpu_custom_call.1} parent=1 // pred_region
      %37 = dma.done [#allocation3], 128
    $region13: #{tpu_custom_call.1} parent=1 // pred_fallthru
      _
    // Predicated region
    $region14: #{tpu_custom_call.1} parent=1 // pred_check
      _
    $region15: #{tpu_custom_call.1} parent=1 // pred_check_branch
      %39 = sbr.rel (0) target = $region17
    $region16: #{tpu_custom_call.1} parent=1 // pred_region
      %41 = dma.done [#allocation6], 16
    $region17: #{tpu_custom_call.1} parent=1 // pred_fallthru
      _
    %v42 = vld [vmem:[#allocation2] sm:$0xf]
    %v43 = vld [vmem:[#allocation2 + $0x4] sm:$0xf]
    %v44 = vunpack.c.l.bf16 %v42
    %v45 = vunpack.c.l.bf16 %v43
    %v46 = vmul.f32 %v44, %v44
    %v47 = vmul.f32 %v45, %v45
    %48 = vadd.xlane.f32.xlu0 %v46
    %v49 = vpop.xlane.xlu0 %48
    %50 = vadd.xlane.f32.xlu0 %v47
    %v51 = vpop.xlane.xlu0 %50
    %v52 = vmul.f32 %v49, 0.03125
    %v53 = vmul.f32 %v51, 0.03125
    %v54 = vadd.f32 %v52, 1e-06
    %v55 = vadd.f32 %v53, 1e-06
    %v56 = vrsqrt.pop %v54
    %v57 = vmul.f32 %v56, %v54
    %v58 = vmul.f32 %v57, %v56
    %v59 = vmul.f32 0.5, %v58
    %v60 = vsub.f32 1.5, %v59
    %v61 = vmul.f32 %v56, %v60
    %vm62 = vweird.f32 %v54
    %vm63 = vweird.f32 %v56
    %vm64 = vmor %vm62, %vm63
    %v65 = vsel %vm64, %v56, %v61
    %v66 = vrsqrt.pop %v55
    %v67 = vmul.f32 %v66, %v55
    %v68 = vmul.f32 %v67, %v66
    %v69 = vmul.f32 0.5, %v68
    %v70 = vsub.f32 1.5, %v69
    %v71 = vmul.f32 %v66, %v70
    %vm72 = vweird.f32 %v55
    %vm73 = vweird.f32 %v66
    %vm74 = vmor %vm72, %vm73
    %v75 = vsel %vm74, %v66, %v71
    %v76 = vld [vmem:[#allocation5] sm:$0x1]
    %v77 = vmul.f32 %v44, %v65
    %v78 = vmul.f32 %v45, %v75
    %v80 = vperm.slane %v76, 0
    %v82 = vmul.f32 %v80, %v77
    %v83 = vmul.f32 %v80, %v78
    %v84 = vpack.c.bf16 %v82, %v82
    %v85 = vpack.c.bf16 %v83, %v83
    %86 = vst [vmem:[#allocation7] sm:$0xf] %v84
    %87 = vst [vmem:[#allocation7 + $0x4] sm:$0xf] %v85
    // Predicated region
    $region18: #{tpu_custom_call.1} parent=1 // pred_check
      _
    $region19: #{tpu_custom_call.1} parent=1 // pred_check_branch
      %89 = sbr.rel (0) target = $region21
    $region20: #{tpu_custom_call.1} parent=1 // pred_region
      %91 = vsyncadd [#allocation4], 0
      %s92 = sshll.u32 [#allocation7], 4
      %s93 = int_to_ptr.vmem [resolvable:$true] %s92
      %s94 = sshll.u32 %s2, 4
      %s95 = int_to_ptr.hbm [resolvable:$true] %s94
      %100 = dma.vmem_to_hbm [thread:$0]  %s93, 128, %s95, [#allocation4], 64, 64, 4
    $region21: #{tpu_custom_call.1} parent=1 // pred_fallthru
      _
    // Predicated region
    $region22: #{tpu_custom_call.1} parent=1 // pred_check
      _
    $region23: #{tpu_custom_call.1} parent=1 // pred_check_branch
      %102 = sbr.rel (0) target = $region25
    $region24: #{tpu_custom_call.1} parent=1 // pred_region
      %104 = dma.done [#allocation4], 128
    $region25: #{tpu_custom_call.1} parent=1 // pred_fallthru
      _
    %105 = vsyncpa [#allocation3], 1
    %106 = vsyncpa [#allocation6], 1
    %107 = vsyncpa [#allocation4], 1

</llo_original>
